<compile_context>
chip_gen: v5e
topology: v5e:2x2
jax: 0.10.0
libtpu: 0.0.40
codegen_flags: <defaults>
</compile_context>

<pallas_src>
import numpy as np
import jax
import jax.numpy as jnp
from jax import lax
from jax.experimental import pallas as pl
from jax.experimental.pallas import tpu as pltpu


def _round_up(x, m):
    return ((x + m - 1) // m) * m


def _fourier_smooth_l1_kernel(pred_ref, tgt_ref, mask_ref, basis_ref, out_ref):
    """Per-tile: x = (pred - tgt) @ [cos; -sin]; smooth-L1 on x*mask; emit partials."""
    ns = basis_ref.shape[1]
    mask = mask_ref[...]                                      # (TILE_N, 1)

    # Single fused MXU matmul (was 4 separate 11-wide matmuls).
    x = jnp.dot(pred_ref[...] - tgt_ref[...], basis_ref[...],
                preferred_element_type=jnp.float32)           # (TILE_N, ns)

    d = x * mask                                              # mask broadcast over ns
    ad = jnp.abs(d)
    sl1 = jnp.where(ad < 1.0, 0.5 * d * d, ad - 0.5)          # beta = 1.0, f32 VPU math
    total = jnp.sum(sl1)
    # PyTorch sums the (N, ns)-expanded mask.
    msum = jnp.sum(mask) * float(ns)

    # Lane-dense (2, 128) partial-sum tile: row 0 = loss partial, row 1 = mask partial.
    row = lax.broadcasted_iota(jnp.int32, (2, 128), 0)
    out_ref[0, :, :] = jnp.where(row == 0, total, msum)


def fourier_loss_rmax_r2c(output, mask, ind, target, fd, ns, tile_n=1024):
    """Pallas implementation of FourierLoss_rmax_R2C.forward.

    output: (B, C, H, W) float, C == 2*(2*fd+1)   (NCHW, as in PyTorch)
    mask:   (B, K) float (0/1)
    ind:    (B, K) int indices into H*W
    target: (B, K, C) float
    """
    B, C, H, W = output.shape
    K2 = 2 * fd + 1
    assert C == 2 * K2, "channel dim must equal 2*(2*fd+1)"

    # --- glue: gather without materializing the full NCHW->NHWC transpose ---
    # Gather K spatial positions per (b, c) on the (B, C, H*W) view, then
    # transpose only the tiny (B, C, K) result.
    feat = output.reshape(B, C, H * W)
    pred = jnp.take_along_axis(feat, ind[:, None, :].astype(jnp.int32), axis=2)  # (B, C, K)
    pred_flat = jnp.transpose(pred, (0, 2, 1)).reshape(-1, C).astype(jnp.float32)
    tgt_flat = target.reshape(-1, C).astype(jnp.float32)
    mask_flat = mask.reshape(-1, 1).astype(jnp.float32)

    # --- host-computed stacked basis:  x = real@cos - imag@sin = coef @ [cos; -sin] ---
    kv = np.arange(-fd, fd + 1, dtype=np.float32)[:, None]     # (2fd+1, 1)
    iv = np.arange(ns, dtype=np.float32)[None, :]               # (1, ns)
    tmat = (2.0 * np.pi / ns) * (kv @ iv)                       # (2fd+1, ns)
    basis = jnp.asarray(
        np.concatenate([np.cos(tmat), -np.sin(tmat)], axis=0), jnp.float32)  # (C, ns)

    # --- tile the N = B*K axis; pad with zeros so padded rows contribute 0 ---
    N = pred_flat.shape[0]
    TILE_N = min(tile_n, _round_up(N, 8))
    Np = _round_up(N, TILE_N)
    if Np != N:
        pad = Np - N
        pred_flat = jnp.pad(pred_flat, ((0, pad), (0, 0)))
        tgt_flat = jnp.pad(tgt_flat, ((0, pad), (0, 0)))
        mask_flat = jnp.pad(mask_flat, ((0, pad), (0, 0)))      # mask=0 => zero contribution
    num_tiles = Np // TILE_N

    partials = pl.pallas_call(
        _fourier_smooth_l1_kernel,
        out_shape=jax.ShapeDtypeStruct((num_tiles, 2, 128), jnp.float32),
        grid=(num_tiles,),
        in_specs=[
            pl.BlockSpec((TILE_N, C), lambda i: (i, 0)),        # pred
            pl.BlockSpec((TILE_N, C), lambda i: (i, 0)),        # target
            pl.BlockSpec((TILE_N, 1), lambda i: (i, 0)),        # mask
            pl.BlockSpec((C, ns), lambda i: (0, 0)),            # stacked basis (resident)
        ],
        out_specs=pl.BlockSpec((1, 2, 128), lambda i: (i, 0, 0)),
        compiler_params=pltpu.CompilerParams(
            dimension_semantics=("parallel",)),                 # per-tile partials -> megacore-safe
    )(pred_flat, tgt_flat, mask_flat, basis)

    loss_sum = jnp.sum(partials[:, 0, 0])
    mask_sum = jnp.sum(partials[:, 1, 0])
    return loss_sum / (mask_sum + 0.0001)


def _reference(output, mask, ind, target, fd, ns):
    """Pure-JAX reference mirroring the PyTorch semantics (incl. full transpose)."""
    B, C, H, W = output.shape
    K2 = 2 * fd + 1
    feat = jnp.transpose(output, (0, 2, 3, 1)).reshape(B, H * W, C)
    pred = jnp.take_along_axis(feat, ind[..., None].astype(jnp.int32), axis=1)

    kv = jnp.arange(-fd, fd + 1, dtype=jnp.float32)[:, None]
    iv = jnp.arange(ns, dtype=jnp.float32)[None, :]
    t = 2.0 * np.pi / ns * (kv @ iv)
    cosm, sinm = jnp.cos(t), jnp.sin(t)

    def f2p_x(coef):
        coef = coef.reshape(-1, C).astype(jnp.float32)
        real, imag = coef[:, :K2], coef[:, K2:]
        return real @ cosm - imag @ sinm

    ftx_t = f2p_x(target)
    ftx_p = f2p_x(pred)
    m = mask.reshape(-1, 1).astype(jnp.float32) * jnp.ones((1, ns), jnp.float32)
    d = ftx_p * m - ftx_t * m
    ad = jnp.abs(d)
    sl1 = jnp.where(ad < 1.0, 0.5 * d * d, ad - 0.5).sum()
    return sl1 / (m.sum() + 0.0001)


if __name__ == "__main__":
    fd, ns = 5, 32          # cfg.train.fd, cfg.train.ns
    B, K = 2, 8             # batch, number of gathered objects per image
    H = W = 16
    C = 2 * (2 * fd + 1)    # 22

    key = jax.random.PRNGKey(0)
    k1, k2, k3, k4 = jax.random.split(key, 4)
    output = jax.random.normal(k1, (B, C, H, W), dtype=jnp.float32)
    target = jax.random.normal(k2, (B, K, C), dtype=jnp.float32)
    ind = jax.random.randint(k3, (B, K), 0, H * W, dtype=jnp.int32)
    mask = (jax.random.uniform(k4, (B, K)) > 0.3).astype(jnp.float32)

    loss = fourier_loss_rmax_r2c(output, mask, ind, target, fd, ns)
    loss = jax.block_until_ready(loss)

    ref = jax.block_until_ready(_reference(output, mask, ind, target, fd, ns))
    assert np.allclose(np.asarray(loss), np.asarray(ref), rtol=5e-2, atol=1e-3), (
        f"mismatch: pallas={loss} ref={ref}")

    print("KERNEL_OK")
</pallas_src>

<mosaic_0001>
module attributes {stable_mosaic.version = 11 : i64} {
  func.func @_fourier_smooth_l1_kernel(%arg0: i32, %arg1: memref<16x22xf32, #tpu.memory_space<vmem>>, %arg2: memref<16x22xf32, #tpu.memory_space<vmem>>, %arg3: memref<16x1xf32, #tpu.memory_space<vmem>>, %arg4: memref<22x32xf32, #tpu.memory_space<vmem>>, %arg5: memref<1x2x128xf32, #tpu.memory_space<vmem>>) attributes {dimension_semantics = [#tpu.dimension_semantics<parallel>], iteration_bounds = array<i64: 1>, scalar_prefetch = 0 : i64, scratch_operands = 0 : i64, tpu.core_type = #tpu.core_type<tc>, window_params = [{transform_indices = @transform_0, window_bounds = array<i64: 16, 22>}, {transform_indices = @transform_1, window_bounds = array<i64: 16, 22>}, {transform_indices = @transform_2, window_bounds = array<i64: 16, 1>}, {pipeline_mode = #tpu.pipeline_mode<synchronous>, transform_indices = @transform_3, window_bounds = array<i64: 22, 32>}, {transform_indices = @transform_4, window_bounds = array<i64: 1, 2, 128>}]} {
    %c0 = arith.constant 0 : index
    %c0_0 = arith.constant 0 : index
    %0 = vector.load %arg3[%c0, %c0_0] : memref<16x1xf32, #tpu.memory_space<vmem>>, vector<16x1xf32>
    %c0_1 = arith.constant 0 : index
    %c0_2 = arith.constant 0 : index
    %1 = vector.load %arg1[%c0_1, %c0_2] : memref<16x22xf32, #tpu.memory_space<vmem>>, vector<16x22xf32>
    %c0_3 = arith.constant 0 : index
    %c0_4 = arith.constant 0 : index
    %2 = vector.load %arg2[%c0_3, %c0_4] : memref<16x22xf32, #tpu.memory_space<vmem>>, vector<16x22xf32>
    %3 = arith.subf %1, %2 : vector<16x22xf32>
    %c0_5 = arith.constant 0 : index
    %c0_6 = arith.constant 0 : index
    %4 = vector.load %arg4[%c0_5, %c0_6] : memref<22x32xf32, #tpu.memory_space<vmem>>, vector<22x32xf32>
    %cst = arith.constant dense<0.000000e+00> : vector<16x32xf32>
    %5 = tpu.matmul %3, %4, %cst {dimension_numbers = #tpu.dot_dimension_numbers<[1], [0], [0], [1], [0, 0, 1, 1], [], []>} : vector<16x22xf32>, vector<22x32xf32>, vector<16x32xf32> -> vector<16x32xf32>
    %6 = vector.broadcast %0 : vector<16x1xf32> to vector<16x32xf32>
    %7 = arith.mulf %5, %6 : vector<16x32xf32>
    %8 = math.absf %7 : vector<16x32xf32>
    %cst_7 = arith.constant 1.000000e+00 : f32
    %9 = vector.broadcast %cst_7 : f32 to vector<16x32xf32>
    %10 = arith.cmpf olt, %8, %9 : vector<16x32xf32>
    %cst_8 = arith.constant 5.000000e-01 : f32
    %11 = vector.broadcast %cst_8 : f32 to vector<16x32xf32>
    %12 = arith.mulf %11, %7 : vector<16x32xf32>
    %13 = arith.mulf %12, %7 : vector<16x32xf32>
    %cst_9 = arith.constant 5.000000e-01 : f32
    %14 = vector.broadcast %cst_9 : f32 to vector<16x32xf32>
    %15 = arith.subf %8, %14 : vector<16x32xf32>
    %16 = arith.select %10, %13, %15 : vector<16x32xi1>, vector<16x32xf32>
    %17 = vector.shape_cast %16 : vector<16x32xf32> to vector<1x16x32xf32>
    %cst_10 = arith.constant dense<0.000000e+00> : vector<1xf32>
    %18 = vector.multi_reduction <add>, %17, %cst_10 [1, 2] : vector<1x16x32xf32> to vector<1xf32>
    %19 = vector.shape_cast %18 : vector<1xf32> to vector<1x1x1xf32>
    %20 = vector.extract %19[0, 0, 0] : f32 from vector<1x1x1xf32>
    %21 = vector.shape_cast %0 : vector<16x1xf32> to vector<1x16x1xf32>
    %cst_11 = arith.constant dense<0.000000e+00> : vector<1xf32>
    %22 = vector.multi_reduction <add>, %21, %cst_11 [1, 2] : vector<1x16x1xf32> to vector<1xf32>
    %23 = vector.shape_cast %22 : vector<1xf32> to vector<1x1x1xf32>
    %24 = vector.extract %23[0, 0, 0] : f32 from vector<1x1x1xf32>
    %cst_12 = arith.constant 3.200000e+01 : f32
    %25 = arith.mulf %24, %cst_12 : f32
    %26 = tpu.iota {dimensions = array<i32: 0>} : vector<2x128xi32>
    %c0_i32 = arith.constant 0 : i32
    %27 = vector.broadcast %c0_i32 : i32 to vector<2x128xi32>
    %28 = arith.cmpi eq, %26, %27 : vector<2x128xi32>
    %29 = vector.broadcast %20 : f32 to vector<2x128xf32>
    %30 = vector.broadcast %25 : f32 to vector<2x128xf32>
    %31 = arith.select %28, %29, %30 : vector<2x128xi1>, vector<2x128xf32>
    %c0_13 = arith.constant 0 : index
    %c0_14 = arith.constant 0 : index
    %c0_15 = arith.constant 0 : index
    %32 = vector.load %arg5[%c0_13, %c0_14, %c0_15] : memref<1x2x128xf32, #tpu.memory_space<vmem>>, vector<1x2x128xf32>
    %33 = vector.shape_cast %32 : vector<1x2x128xf32> to vector<2x128xf32>
    %34 = vector.shape_cast %31 : vector<2x128xf32> to vector<1x2x128xf32>
    tpu.vector_store %arg5[%c0_13, %c0_14, %c0_15], %34 {strides = array<i32>} : memref<1x2x128xf32, #tpu.memory_space<vmem>>, vector<1x2x128xf32>,
    return
  }
  func.func @transform_0(%arg0: i32) -> (i32, i32) {
    %c0_i32 = arith.constant 0 : i32
    %c0_i32_0 = arith.constant 0 : i32
    return %arg0, %c0_i32 : i32, i32
  }
  func.func @transform_1(%arg0: i32) -> (i32, i32) {
    %c0_i32 = arith.constant 0 : i32
    %c0_i32_0 = arith.constant 0 : i32
    return %arg0, %c0_i32 : i32, i32
  }
  func.func @transform_2(%arg0: i32) -> (i32, i32) {
    %c0_i32 = arith.constant 0 : i32
    %c0_i32_0 = arith.constant 0 : i32
    return %arg0, %c0_i32 : i32, i32
  }
  func.func @transform_3(%arg0: i32) -> (i32, i32) {
    %c0_i32 = arith.constant 0 : i32
    %c0_i32_0 = arith.constant 0 : i32
    %c0_i32_1 = arith.constant 0 : i32
    return %c0_i32, %c0_i32_0 : i32, i32
  }
  func.func @transform_4(%arg0: i32) -> (i32, i32, i32) {
    %c0_i32 = arith.constant 0 : i32
    %c0_i32_0 = arith.constant 0 : i32
    %c0_i32_1 = arith.constant 0 : i32
    return %arg0, %c0_i32, %c0_i32_0 : i32, i32, i32
  }
}

</mosaic_0001>

<llo_original>
// kernel: tpu_custom_call.1
$region0: #{tpu_custom_call.1}
  #allocation0 [shape = 'u32[]', space=smem, size = 0x4, offset = 0x4, fixed_abs, tag = 'smem constant byte address 0x4 - core index']
  #allocation1 [shape = 'u32[72,128]{1,0:T(1,128)}', space=vmem, size = 0x9000, scoped, tag = 'internal scratch']
  %s0 = inlined_call_operand.vmem [shape: f32[16,22], index: 0, kind: input, shape index: {}]
  %s1 = inlined_call_operand.hbm [shape: f32[16,22], index: 1, kind: input, shape index: {}]
  %s2 = inlined_call_operand.vmem [shape: f32[16,1], index: 2, kind: input, shape index: {}]
  %s3 = inlined_call_operand.hbm [shape: f32[22,32], index: 3, kind: input, shape index: {}]
  %s4 = inlined_call_operand.hbm [shape: f32[1,2,128], index: 4, kind: output, shape index: {}]
  %s5 = sld [smem:[#allocation0]]
  $region34: #{tpu_custom_call.1} parent=0
    _
  %s7 = ssub.s32 1, %s5
  %s8 = scalar_select 0, %s7, %s5
  $region1: #{tpu_custom_call.1} parent=0
    #allocation2 [shape = 'u8[8192]{0}', space=vmem, size = 0x2000, scoped, tag = 'input window, operand 1, single buffered']
    #allocation3 [shape = 's32[1]{0}', space=sflag, size = 0x4, scoped, tag = 'scoped memory for tpu_custom_call.1']
    #allocation4 [shape = 's32[1]{0}', space=sflag, size = 0x4, scoped, tag = 'scoped memory for tpu_custom_call.1']
    #allocation5 [shape = 'u8[12288]{0}', space=vmem, size = 0x3000, scoped, tag = 'input window, operand 3, single buffered']
    #allocation6 [shape = 's32[1]{0}', space=sflag, size = 0x4, scoped, tag = 'scoped memory for tpu_custom_call.1']
    #allocation7 [shape = 'u8[1024]{0}', space=vmem, size = 0x400, scoped, tag = 'output window, operand 0, single buffered']
    %9 = vsyncpa [#allocation3], 0
    %10 = vsyncpa [#allocation6], 0
    %11 = vsyncpa [#allocation4], 0
    // Predicated region
    $region2: #{tpu_custom_call.1} parent=1 // pred_check
      _
    $region3: #{tpu_custom_call.1} parent=1 // pred_check_branch
      %13 = sbr.rel (0) target = $region5
    $region4: #{tpu_custom_call.1} parent=1 // pred_region
      _
    $region5: #{tpu_custom_call.1} parent=1 // pred_fallthru
      _
    // Predicated region
    $region6: #{tpu_custom_call.1} parent=1 // pred_check
      _
    $region7: #{tpu_custom_call.1} parent=1 // pred_check_branch
      %15 = sbr.rel (0) target = $region9
    $region8: #{tpu_custom_call.1} parent=1 // pred_region
      %17 = vsyncadd [#allocation3], 0
      %s18 = sshll.u32 %s1, 4
      %s19 = int_to_ptr.hbm [resolvable:$true] %s18
      %s20 = sshll.u32 [#allocation2], 4
      %s21 = int_to_ptr.vmem [resolvable:$true] %s20
      %26 = dma.hbm_to_vmem [thread:$0]  %s19, 256, %s21, [#allocation3], 128, 128, 8
    $region9: #{tpu_custom_call.1} parent=1 // pred_fallthru
      _
    // Predicated region
    $region10: #{tpu_custom_call.1} parent=1 // pred_check
      _
    $region11: #{tpu_custom_call.1} parent=1 // pred_check_branch
      %28 = sbr.rel (0) target = $region13
    $region12: #{tpu_custom_call.1} parent=1 // pred_region
      _
    $region13: #{tpu_custom_call.1} parent=1 // pred_fallthru
      _
    // Predicated region
    $region14: #{tpu_custom_call.1} parent=1 // pred_check
      _
    $region15: #{tpu_custom_call.1} parent=1 // pred_check_branch
      %30 = sbr.rel (0) target = $region17
    $region16: #{tpu_custom_call.1} parent=1 // pred_region
      %32 = vsyncadd [#allocation6], 0
      %s33 = sshll.u32 %s3, 4
      %s34 = int_to_ptr.hbm [resolvable:$true] %s33
      %s35 = sshll.u32 [#allocation5], 4
      %s36 = int_to_ptr.vmem [resolvable:$true] %s35
      %41 = dma.hbm_to_vmem [thread:$0]  %s34, 384, %s36, [#allocation6], 128, 128, 8
    $region17: #{tpu_custom_call.1} parent=1 // pred_fallthru
      _
    // Predicated region
    $region18: #{tpu_custom_call.1} parent=1 // pred_check
      _
    $region19: #{tpu_custom_call.1} parent=1 // pred_check_branch
      %43 = sbr.rel (0) target = $region21
    $region20: #{tpu_custom_call.1} parent=1 // pred_region
      %45 = dma.done [#allocation3], 256
    $region21: #{tpu_custom_call.1} parent=1 // pred_fallthru
      _
    // Predicated region
    $region22: #{tpu_custom_call.1} parent=1 // pred_check
      _
    $region23: #{tpu_custom_call.1} parent=1 // pred_check_branch
      %47 = sbr.rel (0) target = $region25
    $region24: #{tpu_custom_call.1} parent=1 // pred_region
      %49 = dma.done [#allocation6], 384
    $region25: #{tpu_custom_call.1} parent=1 // pred_fallthru
      _
    %v50 = vld [vmem:[%s2] sm:$0xff]
    %v51 = vld [vmem:[%s2 + $0x8] sm:$0xff]
    %v52 = vld [vmem:[%s0] sm:$0xff]
    %v53 = vld [vmem:[%s0 + $0x8] sm:$0xff]
    %v54 = vld [vmem:[#allocation2] sm:$0xff]
    %v55 = vld [vmem:[#allocation2 + $0x8] sm:$0xff]
    %v56 = vsub.f32 %v52, %v54
    %v57 = vsub.f32 %v53, %v55
    %v58 = vld [vmem:[#allocation5] sm:$0xff]
    %v59 = vld [vmem:[#allocation5 + $0x8] sm:$0xff]
    %v60 = vld [vmem:[#allocation5 + $0x10] sm:$0x3f]
    %vm61 = vcmask 179200
    %v63 = vsel %vm61, %v56, 0
    %v66 = vsel %vm61, %v57, 0
    %vm68 = vcmask 1045504
    %v70 = vsel %vm68, %v60, 0
    %72 = vmatpush.msra.mxu0 0.0
    %73 = vmatpush.msra.mxu0 0.0
    %74 = vmatpush.msra.mxu0 0.0
    %75 = vmatpush.msra.mxu0 0.0
    %76 = vmatpush.msra.mxu0 0.0
    %77 = vmatpush.msra.mxu0 0.0
    %78 = vmatpush.msra.mxu0 0.0
    %79 = vmatpush.msra.mxu0 0.0
    %80 = vmatpush.msra.mxu0 0.0
    %81 = vmatpush.msra.mxu0 0.0
    %82 = vmatpush.msra.mxu0 0.0
    %83 = vmatpush.msra.mxu0 0.0
    %84 = vmatpush.msra.mxu0 0.0
    %85 = vmatpush.msra.mxu0 %v70
    %86 = vmatpush.msra.mxu0 %v59
    %87 = vmatpush.msra.mxu0 %v58
    %88 = vmatmul.f32.gmra.mxu0 %v63
    %v89 = vpop.f32.mrf.mxu0
    %v90 = vadd.f32 0.0, %v89
    %91 = vmatmul.f32.gmra.mxu0 %v66
    %v92 = vpop.f32.mrf.mxu0
    %v93 = vadd.f32 0.0, %v92
    %94 = vdwg.mxu0
    %96 = vset.pattern.permute.xlu0 0
    %97 = vperm.xlu0 %96, %v50
    %v98 = vpop.permute.xlu0 %97
    %101 = vset.pattern.permute.xlu0 0
    %102 = vperm.xlu0 %101, %v51
    %v103 = vpop.permute.xlu0 %102
    %v105 = vmul.f32 %v90, %v98
    %v106 = vmul.f32 %v93, %v103
    %v107 = vand.u32 2147483647, %v105
    %v108 = vand.u32 2147483647, %v106
    %vm109 = vcmp.lt.f32.partialorder %v107, 1.0
    %vm110 = vcmp.lt.f32.partialorder %v108, 1.0
    %v111 = vmul.f32 %v105, 0.5
    %v112 = vmul.f32 %v106, 0.5
    %v113 = vmul.f32 %v111, %v105
    %v114 = vmul.f32 %v112, %v106
    %v115 = vsub.f32 %v107, 0.5
    %v116 = vsub.f32 %v108, 0.5
    %v117 = vsel %vm109, %v113, %v115
    %v118 = vsel %vm110, %v114, %v116
    %vm119 = vcmask 261120
    %v120 = vsel %vm119, %v117, 0.0
    %v121 = vsel %vm119, %v118, 0.0
    %v122 = vadd.f32 %v120, %v121
    %123 = vadd.xlane.f32.xlu0 %v122
    %v124 = vpop.xlane.xlu0 %123
    %v125 = vrot.slane %v124, 4
    %v126 = vadd.f32 %v124, %v125
    %v127 = vrot.slane %v126, 2
    %v128 = vadd.f32 %v126, %v127
    %v129 = vrot.slane %v128, 1
    %v130 = vadd.f32 %v128, %v129
    %s131 = vtos %v130
    %vm132 = vcmask 7168
    %v133 = vsel %vm132, %v50, 0.0
    %v134 = vsel %vm132, %v51, 0.0
    %v135 = vadd.f32 %v133, %v134
    %136 = vadd.xlane.f32.xlu0 %v135
    %v137 = vpop.xlane.xlu0 %136
    %v138 = vrot.slane %v137, 4
    %v139 = vadd.f32 %v137, %v138
    %v140 = vrot.slane %v139, 2
    %v141 = vadd.f32 %v139, %v140
    %v142 = vrot.slane %v141, 1
    %v143 = vadd.f32 %v141, %v142
    %s144 = vtos %v143
    %s145 = smul.f32 %s144, 32.0
    %v146 = vlaneseq
    %v147 = vshrl.u32 %v146, 7
    %vm148 = vcmp.eq.s32.totalorder %v147, 0
    %v149 = vstv %s131
    %v150 = vstv %s145
    %v151 = vsel %vm148, %v149, %v150
    %152 = vst [vmem:[#allocation7] sm:$0x3] %v151
    // Predicated region
    $region26: #{tpu_custom_call.1} parent=1 // pred_check
      _
    $region27: #{tpu_custom_call.1} parent=1 // pred_check_branch
      %154 = sbr.rel (0) target = $region29
    $region28: #{tpu_custom_call.1} parent=1 // pred_region
      %156 = vsyncadd [#allocation4], 0
      %s158 = sshll.u32 [#allocation7], 4
      %s159 = int_to_ptr.vmem [resolvable:$true] %s158
      %s160 = sshll.u32 %s4, 4
      %s161 = int_to_ptr.hbm [resolvable:$true] %s160
      %163 = dma.vmem_to_hbm [thread:$0]  %s159, 32, %s161, [#allocation4]
    $region29: #{tpu_custom_call.1} parent=1 // pred_fallthru
      _
    // Predicated region
    $region30: #{tpu_custom_call.1} parent=1 // pred_check
      _
    $region31: #{tpu_custom_call.1} parent=1 // pred_check_branch
      %165 = sbr.rel (0) target = $region33
    $region32: #{tpu_custom_call.1} parent=1 // pred_region
      %167 = dma.done [#allocation4], 32
    $region33: #{tpu_custom_call.1} parent=1 // pred_fallthru
      _
    %168 = vsyncpa [#allocation3], 1
    %169 = vsyncpa [#allocation6], 1
    %170 = vsyncpa [#allocation4], 1

</llo_original>
